<compile_context>
chip_gen: v7x
topology: tpu7x:2x2x1
jax: 0.10.0
libtpu: 0.0.40
codegen_flags: <defaults>
</compile_context>

<pallas_src>
import functools

import jax
import jax.numpy as jnp
from jax.experimental import pallas as pl
from jax.experimental.pallas import tpu as pltpu


_VMEM_LIMIT_BYTES = 32 * 1024 * 1024  # safe on v7x (64 MiB phys), raises v5e's 16 MiB default


def _round_up(a, m):
    return ((a + m - 1) // m) * m


def _choose_tile(c, n, vmem_budget_bytes=24 * 1024 * 1024, max_tn=8192):
    """Pick a lane-dense spatial tile TN (multiple of 128) and the padded N."""
    # ~10 f32-sized (C, TN) buffers live per grid step (double-buffered in/out + theta/phi/g).
    cap = max(128, (vmem_budget_bytes // (10 * 4 * c)) // 128 * 128)
    tn = min(cap, max_tn, _round_up(n, 128))
    return tn, _round_up(n, tn)


def _attn_logits_kernel(x_ref, wtp_ref, btp_ref, attn_ref, *, c, tn, n_valid, padded):
    """Pass 1: accumulate logits = theta @ phi^T over N tiles; softmax on the last tile."""
    t = pl.program_id(1)

    @pl.when(t == 0)
    def _init():
        attn_ref[...] = jnp.zeros_like(attn_ref)

    x_bf = x_ref[...].astype(jnp.bfloat16)                            # (C, TN)
    # fused theta/phi pointwise conv: one (2C, C) @ (C, TN) bf16 MXU matmul, f32 accumulate
    tp = jnp.dot(wtp_ref[...], x_bf, preferred_element_type=jnp.float32)
    tp = tp + btp_ref[...]                                            # (2C, TN) f32
    theta = tp[:c]
    phi = tp[c:]
    if padded:
        # zero-padded x columns still pick up the conv bias; mask them out of the logits
        col = t * tn + jax.lax.broadcasted_iota(jnp.int32, (1, tn), 1)
        theta = jnp.where(col < n_valid, theta, 0.0)
    attn_ref[...] += jax.lax.dot_general(
        theta.astype(jnp.bfloat16), phi.astype(jnp.bfloat16),
        dimension_numbers=(((1,), (1,)), ((), ())),                   # theta @ phi^T
        preferred_element_type=jnp.float32)

    @pl.when(t == pl.num_programs(1) - 1)
    def _softmax():
        a = attn_ref[...]
        a = jnp.exp(a - jnp.max(a, axis=-1, keepdims=True))
        attn_ref[...] = a * pl.reciprocal(jnp.sum(a, axis=-1, keepdims=True), approx=True)


def _attn_apply_kernel(x_ref, attn_ref, wg_ref, bg_ref, beta_ref, o_ref):
    """Pass 2: o = x + beta * attn @ (Wg @ x + bg), per (C, TN) tile."""
    x = x_ref[...]                                                    # (C, TN) f32
    g = jnp.dot(wg_ref[...], x.astype(jnp.bfloat16),
                preferred_element_type=jnp.float32) + bg_ref[...]
    out = jnp.dot(attn_ref[...].astype(jnp.bfloat16), g.astype(jnp.bfloat16),
                  preferred_element_type=jnp.float32)
    o_ref[...] = (x + beta_ref[0] * out).astype(o_ref.dtype)


@jax.jit
def rsa_block(x, wt, bt, wp, bp, wg, bg, beta):
    """x: (B, C, D, H, W) f32; w*: (C, C) (squeezed 1x1x1 Conv3d weights); b*: (C,); beta scalar."""
    B, C, D, H, W = x.shape
    N = D * H * W
    tn, n_pad = _choose_tile(C, N)
    nt = n_pad // tn

    x2 = x.reshape(B, C, N)
    if n_pad != N:
        x2 = jnp.pad(x2, ((0, 0), (0, 0), (0, n_pad - N)))

    # fused theta/phi weights in bf16 for the MXU; biases stay f32
    wtp = jnp.concatenate([wt, wp], axis=0).astype(jnp.bfloat16)           # (2C, C)
    btp = jnp.concatenate([bt, bp], axis=0).reshape(2 * C, 1).astype(jnp.float32)
    wg_bf = wg.astype(jnp.bfloat16)                                        # (C, C)
    bg2 = bg.reshape(C, 1).astype(jnp.float32)
    beta1 = jnp.asarray(beta, jnp.float32).reshape(1)

    kern1 = functools.partial(_attn_logits_kernel, c=C, tn=tn, n_valid=N,
                              padded=(n_pad != N))
    attn = pl.pallas_call(
        kern1,
        out_shape=jax.ShapeDtypeStruct((B, C, C), jnp.float32),
        grid_spec=pltpu.PrefetchScalarGridSpec(
            num_scalar_prefetch=0,
            grid=(B, nt),
            in_specs=[
                pl.BlockSpec((None, C, tn), lambda b, t: (b, 0, t)),       # x tile
                pl.BlockSpec((2 * C, C), lambda b, t: (0, 0)),             # [Wt; Wp]
                pl.BlockSpec((2 * C, 1), lambda b, t: (0, 0)),             # [bt; bp]
            ],
            out_specs=pl.BlockSpec((None, C, C), lambda b, t: (b, 0, 0)),  # per-batch probs
        ),
        compiler_params=pltpu.CompilerParams(
            dimension_semantics=("parallel", "arbitrary"),
            vmem_limit_bytes=_VMEM_LIMIT_BYTES),
    )(x2, wtp, btp)

    # NOTE: input_output_aliases={0: 0} could reuse x2's HBM buffer for the output
    # (footprint-only win); kept un-aliased for robustness since x2 also feeds pass 1.
    out = pl.pallas_call(
        _attn_apply_kernel,
        out_shape=jax.ShapeDtypeStruct((B, C, n_pad), x.dtype),
        grid_spec=pltpu.PrefetchScalarGridSpec(
            num_scalar_prefetch=0,
            grid=(B, nt),
            in_specs=[
                pl.BlockSpec((None, C, tn), lambda b, t: (b, 0, t)),       # x tile
                pl.BlockSpec((None, C, C), lambda b, t: (b, 0, 0)),        # attn probs
                pl.BlockSpec((C, C), lambda b, t: (0, 0)),                 # Wg
                pl.BlockSpec((C, 1), lambda b, t: (0, 0)),                 # bg
                pl.BlockSpec(memory_space=pltpu.MemorySpace.SMEM),         # beta scalar
            ],
            out_specs=pl.BlockSpec((None, C, tn), lambda b, t: (b, 0, t)),
        ),
        compiler_params=pltpu.CompilerParams(
            dimension_semantics=("parallel", "parallel"),
            vmem_limit_bytes=_VMEM_LIMIT_BYTES),
    )(x2, attn, wg_bf, bg2, beta1)

    if n_pad != N:
        out = out[:, :, :N]
    return out.reshape(B, C, D, H, W)


def rsa_block_ref(x, wt, bt, wp, bp, wg, bg, beta, compute_dtype=jnp.float32):
    """Pure-JAX reference mirroring the PyTorch forward (matmul inputs in compute_dtype)."""
    B, C = x.shape[:2]
    xf = x.reshape(B, C, -1)
    xc = xf.astype(compute_dtype)

    def conv(w, b):
        return jnp.einsum('oc,bcn->bon', w.astype(compute_dtype), xc,
                          preferred_element_type=jnp.float32) + b[None, :, None]

    theta, phi, g = conv(wt, bt), conv(wp, bp), conv(wg, bg)
    logits = jnp.einsum('bcn,bdn->bcd', theta.astype(compute_dtype),
                        phi.astype(compute_dtype),
                        preferred_element_type=jnp.float32)          # theta @ phi^T
    attn = jax.nn.softmax(logits, axis=-1)
    out = jnp.einsum('bcd,bdn->bcn', attn.astype(compute_dtype),
                     g.astype(compute_dtype),
                     preferred_element_type=jnp.float32)
    return (xf + beta * out).reshape(x.shape)


if __name__ == "__main__":
    B, C, D, H, W = 2, 8, 4, 8, 8     # small NCDHW volume (N = 256)

    key = jax.random.PRNGKey(0)
    kx, kwt, kbt, kwp, kbp, kwg, kbg = jax.random.split(key, 7)

    x = jax.random.normal(kx, (B, C, D, H, W), jnp.float32)
    scale = 1.0 / jnp.sqrt(C)         # nn.Conv3d default init range
    wt = jax.random.uniform(kwt, (C, C), jnp.float32, -scale, scale)
    bt = jax.random.uniform(kbt, (C,), jnp.float32, -scale, scale)
    wp = jax.random.uniform(kwp, (C, C), jnp.float32, -scale, scale)
    bp = jax.random.uniform(kbp, (C,), jnp.float32, -scale, scale)
    wg = jax.random.uniform(kwg, (C, C), jnp.float32, -scale, scale)
    bg = jax.random.uniform(kbg, (C,), jnp.float32, -scale, scale)

    # Faithful to __init__: axial_beta initialized to 0.0 -> output == input
    y0 = jax.block_until_ready(rsa_block(x, wt, bt, wp, bp, wg, bg, 0.0))
    assert jnp.allclose(y0, x, atol=1e-6, rtol=1e-6)

    # Nonzero gate exercising the attention path.
    beta = 0.5
    y = jax.block_until_ready(rsa_block(x, wt, bt, wp, bp, wg, bg, beta))
    # precision-matched reference (bf16 matmul inputs, f32 accumulation)
    y_bf16 = rsa_block_ref(x, wt, bt, wp, bp, wg, bg, beta, compute_dtype=jnp.bfloat16)
    assert jnp.allclose(y, y_bf16, atol=5e-3, rtol=5e-3)
    # loose sanity check against the full-f32 module semantics
    y_f32 = rsa_block_ref(x, wt, bt, wp, bp, wg, bg, beta)
    assert jnp.allclose(y, y_f32, atol=5e-2, rtol=5e-2)

    print("KERNEL_OK")
</pallas_src>

<mosaic_0001>
module attributes {stable_mosaic.version = 11 : i64} {
  func.func @_attn_apply_kernel(%arg0: i32, %arg1: i32, %arg2: memref<1x8x256xf32, #tpu.memory_space<vmem>>, %arg3: memref<1x8x8xf32, #tpu.memory_space<vmem>>, %arg4: memref<8x8xbf16, #tpu.memory_space<vmem>>, %arg5: memref<8x1xf32, #tpu.memory_space<vmem>>, %arg6: memref<1xf32, #tpu.memory_space<smem>>, %arg7: memref<1x8x256xf32, #tpu.memory_space<vmem>>) attributes {dimension_semantics = [#tpu.dimension_semantics<parallel>, #tpu.dimension_semantics<parallel>], iteration_bounds = array<i64: 2, 1>, scalar_prefetch = 0 : i64, scratch_operands = 0 : i64, tpu.core_type = #tpu.core_type<tc>, window_params = [{transform_indices = @transform_0, window_bounds = array<i64: 1, 8, 256>}, {transform_indices = @transform_1, window_bounds = array<i64: 1, 8, 8>}, {pipeline_mode = #tpu.pipeline_mode<synchronous>, transform_indices = @transform_2, window_bounds = array<i64: 8, 8>}, {pipeline_mode = #tpu.pipeline_mode<synchronous>, transform_indices = @transform_3, window_bounds = array<i64: 8, 1>}, {transform_indices = @transform_4, window_bounds = array<i64: 1>}, {transform_indices = @transform_5, window_bounds = array<i64: 1, 8, 256>}]} {
    %c0 = arith.constant 0 : index
    %c0_0 = arith.constant 0 : index
    %c0_1 = arith.constant 0 : index
    %0 = vector.load %arg2[%c0, %c0_0, %c0_1] : memref<1x8x256xf32, #tpu.memory_space<vmem>>, vector<1x8x256xf32>
    %1 = vector.shape_cast %0 : vector<1x8x256xf32> to vector<8x256xf32>
    %c0_2 = arith.constant 0 : index
    %c0_3 = arith.constant 0 : index
    %2 = vector.load %arg4[%c0_2, %c0_3] : memref<8x8xbf16, #tpu.memory_space<vmem>>, vector<8x8xbf16>
    %3 = arith.truncf %1 : vector<8x256xf32> to vector<8x256xbf16>
    %cst = arith.constant dense<0.000000e+00> : vector<8x256xf32>
    %4 = tpu.matmul %2, %3, %cst {dimension_numbers = #tpu.dot_dimension_numbers<[1], [0], [0], [1], [0, 0, 1, 1], [], []>} : vector<8x8xbf16>, vector<8x256xbf16>, vector<8x256xf32> -> vector<8x256xf32>
    %c0_4 = arith.constant 0 : index
    %c0_5 = arith.constant 0 : index
    %5 = vector.load %arg5[%c0_4, %c0_5] : memref<8x1xf32, #tpu.memory_space<vmem>>, vector<8x1xf32>
    %6 = vector.broadcast %5 : vector<8x1xf32> to vector<8x256xf32>
    %7 = arith.addf %4, %6 : vector<8x256xf32>
    %c0_6 = arith.constant 0 : index
    %c0_7 = arith.constant 0 : index
    %c0_8 = arith.constant 0 : index
    %8 = vector.load %arg3[%c0_6, %c0_7, %c0_8] : memref<1x8x8xf32, #tpu.memory_space<vmem>>, vector<1x8x8xf32>
    %9 = vector.shape_cast %8 : vector<1x8x8xf32> to vector<8x8xf32>
    %10 = arith.truncf %9 : vector<8x8xf32> to vector<8x8xbf16>
    %11 = arith.truncf %7 : vector<8x256xf32> to vector<8x256xbf16>
    %cst_9 = arith.constant dense<0.000000e+00> : vector<8x256xf32>
    %12 = tpu.matmul %10, %11, %cst_9 {dimension_numbers = #tpu.dot_dimension_numbers<[1], [0], [0], [1], [0, 0, 1, 1], [], []>} : vector<8x8xbf16>, vector<8x256xbf16>, vector<8x256xf32> -> vector<8x256xf32>
    %c0_10 = arith.constant 0 : index
    %13 = memref.load %arg6[%c0_10] : memref<1xf32, #tpu.memory_space<smem>>
    %14 = vector.broadcast %13 : f32 to vector<8x256xf32>
    %15 = arith.mulf %14, %12 : vector<8x256xf32>
    %16 = arith.addf %1, %15 : vector<8x256xf32>
    %c0_11 = arith.constant 0 : index
    %c0_12 = arith.constant 0 : index
    %c0_13 = arith.constant 0 : index
    %17 = vector.load %arg7[%c0_11, %c0_12, %c0_13] : memref<1x8x256xf32, #tpu.memory_space<vmem>>, vector<1x8x256xf32>
    %18 = vector.shape_cast %17 : vector<1x8x256xf32> to vector<8x256xf32>
    %19 = vector.shape_cast %16 : vector<8x256xf32> to vector<1x8x256xf32>
    tpu.vector_store %arg7[%c0_11, %c0_12, %c0_13], %19 {strides = array<i32>} : memref<1x8x256xf32, #tpu.memory_space<vmem>>, vector<1x8x256xf32>,
    return
  }
  func.func @transform_0(%arg0: i32, %arg1: i32) -> (i32, i32, i32) {
    %c0_i32 = arith.constant 0 : i32
    %c0_i32_0 = arith.constant 0 : i32
    return %arg0, %c0_i32, %arg1 : i32, i32, i32
  }
  func.func @transform_1(%arg0: i32, %arg1: i32) -> (i32, i32, i32) {
    %c0_i32 = arith.constant 0 : i32
    %c0_i32_0 = arith.constant 0 : i32
    %c0_i32_1 = arith.constant 0 : i32
    return %arg0, %c0_i32, %c0_i32_0 : i32, i32, i32
  }
  func.func @transform_2(%arg0: i32, %arg1: i32) -> (i32, i32) {
    %c0_i32 = arith.constant 0 : i32
    %c0_i32_0 = arith.constant 0 : i32
    %c0_i32_1 = arith.constant 0 : i32
    return %c0_i32, %c0_i32_0 : i32, i32
  }
  func.func @transform_3(%arg0: i32, %arg1: i32) -> (i32, i32) {
    %c0_i32 = arith.constant 0 : i32
    %c0_i32_0 = arith.constant 0 : i32
    %c0_i32_1 = arith.constant 0 : i32
    return %c0_i32, %c0_i32_0 : i32, i32
  }
  func.func @transform_4(%arg0: i32, %arg1: i32) -> i32 {
    %c0_i32 = arith.constant 0 : i32
    %c0_i32_0 = arith.constant 0 : i32
    return %c0_i32 : i32
  }
  func.func @transform_5(%arg0: i32, %arg1: i32) -> (i32, i32, i32) {
    %c0_i32 = arith.constant 0 : i32
    %c0_i32_0 = arith.constant 0 : i32
    return %arg0, %c0_i32, %arg1 : i32, i32, i32
  }
}

module attributes {stable_mosaic.version = 11 : i64} {
  func.func @_attn_logits_kernel(%arg0: i32, %arg1: i32, %arg2: memref<1x8x256xf32, #tpu.memory_space<vmem>>, %arg3: memref<16x8xbf16, #tpu.memory_space<vmem>>, %arg4: memref<16x1xf32, #tpu.memory_space<vmem>>, %arg5: memref<1x8x8xf32, #tpu.memory_space<vmem>>) attributes {dimension_semantics = [#tpu.dimension_semantics<parallel>, #tpu.dimension_semantics<arbitrary>], iteration_bounds = array<i64: 2, 1>, scalar_prefetch = 0 : i64, scratch_operands = 0 : i64, tpu.core_type = #tpu.core_type<tc>, window_params = [{transform_indices = @transform_0, window_bounds = array<i64: 1, 8, 256>}, {pipeline_mode = #tpu.pipeline_mode<synchronous>, transform_indices = @transform_1, window_bounds = array<i64: 16, 8>}, {pipeline_mode = #tpu.pipeline_mode<synchronous>, transform_indices = @transform_2, window_bounds = array<i64: 16, 1>}, {transform_indices = @transform_3, window_bounds = array<i64: 1, 8, 8>}]} {
    %c0_i32 = arith.constant 0 : i32
    %0 = arith.cmpi eq, %arg1, %c0_i32 : i32
    %1 = arith.extui %0 : i1 to i32
    %c0_i32_0 = arith.constant 0 : i32
    %2 = arith.cmpi ne, %1, %c0_i32_0 : i32
    scf.if %2 {
      %cst_16 = arith.constant 0.000000e+00 : f32
      %25 = vector.broadcast %cst_16 : f32 to vector<8x8xf32>
      %c0_17 = arith.constant 0 : index
      %c0_18 = arith.constant 0 : index
      %c0_19 = arith.constant 0 : index
      %26 = vector.load %arg5[%c0_17, %c0_18, %c0_19] : memref<1x8x8xf32, #tpu.memory_space<vmem>>, vector<1x8x8xf32>
      %27 = vector.shape_cast %26 : vector<1x8x8xf32> to vector<8x8xf32>
      %28 = vector.shape_cast %25 : vector<8x8xf32> to vector<1x8x8xf32>
      tpu.vector_store %arg5[%c0_17, %c0_18, %c0_19], %28 {strides = array<i32>} : memref<1x8x8xf32, #tpu.memory_space<vmem>>, vector<1x8x8xf32>,
    } else {
    }
    %c0 = arith.constant 0 : index
    %c0_1 = arith.constant 0 : index
    %c0_2 = arith.constant 0 : index
    %3 = vector.load %arg2[%c0, %c0_1, %c0_2] : memref<1x8x256xf32, #tpu.memory_space<vmem>>, vector<1x8x256xf32>
    %4 = vector.shape_cast %3 : vector<1x8x256xf32> to vector<8x256xf32>
    %5 = arith.truncf %4 : vector<8x256xf32> to vector<8x256xbf16>
    %c0_3 = arith.constant 0 : index
    %c0_4 = arith.constant 0 : index
    %6 = vector.load %arg3[%c0_3, %c0_4] : memref<16x8xbf16, #tpu.memory_space<vmem>>, vector<16x8xbf16>
    %cst = arith.constant dense<0.000000e+00> : vector<16x256xf32>
    %7 = tpu.matmul %6, %5, %cst {dimension_numbers = #tpu.dot_dimension_numbers<[1], [0], [0], [1], [0, 0, 1, 1], [], []>} : vector<16x8xbf16>, vector<8x256xbf16>, vector<16x256xf32> -> vector<16x256xf32>
    %c0_5 = arith.constant 0 : index
    %c0_6 = arith.constant 0 : index
    %8 = vector.load %arg4[%c0_5, %c0_6] : memref<16x1xf32, #tpu.memory_space<vmem>>, vector<16x1xf32>
    %9 = vector.broadcast %8 : vector<16x1xf32> to vector<16x256xf32>
    %10 = arith.addf %7, %9 : vector<16x256xf32>
    %11 = vector.extract_strided_slice %10 {offsets = [0, 0], sizes = [8, 256], strides = [1, 1]} : vector<16x256xf32> to vector<8x256xf32>
    %12 = vector.extract_strided_slice %10 {offsets = [8, 0], sizes = [8, 256], strides = [1, 1]} : vector<16x256xf32> to vector<8x256xf32>
    %c0_7 = arith.constant 0 : index
    %c0_8 = arith.constant 0 : index
    %c0_9 = arith.constant 0 : index
    %13 = vector.load %arg5[%c0_7, %c0_8, %c0_9] : memref<1x8x8xf32, #tpu.memory_space<vmem>>, vector<1x8x8xf32>
    %14 = vector.shape_cast %13 : vector<1x8x8xf32> to vector<8x8xf32>
    %15 = arith.truncf %11 : vector<8x256xf32> to vector<8x256xbf16>
    %16 = arith.truncf %12 : vector<8x256xf32> to vector<8x256xbf16>
    %cst_10 = arith.constant dense<0.000000e+00> : vector<8x8xf32>
    %17 = tpu.matmul %15, %16, %cst_10 {dimension_numbers = #tpu.dot_dimension_numbers<[1], [1], [0], [0], [0, 0, 1, 0], [], []>} : vector<8x256xbf16>, vector<8x256xbf16>, vector<8x8xf32> -> vector<8x8xf32>
    %18 = arith.addf %14, %17 : vector<8x8xf32>
    %c0_11 = arith.constant 0 : index
    %c0_12 = arith.constant 0 : index
    %c0_13 = arith.constant 0 : index
    %19 = vector.load %arg5[%c0_11, %c0_12, %c0_13] : memref<1x8x8xf32, #tpu.memory_space<vmem>>, vector<1x8x8xf32>
    %20 = vector.shape_cast %19 : vector<1x8x8xf32> to vector<8x8xf32>
    %21 = vector.shape_cast %18 : vector<8x8xf32> to vector<1x8x8xf32>
    tpu.vector_store %arg5[%c0_11, %c0_12, %c0_13], %21 {strides = array<i32>} : memref<1x8x8xf32, #tpu.memory_space<vmem>>, vector<1x8x8xf32>,
    %c0_i32_14 = arith.constant 0 : i32
    %22 = arith.cmpi eq, %arg1, %c0_i32_14 : i32
    %23 = arith.extui %22 : i1 to i32
    %c0_i32_15 = arith.constant 0 : i32
    %24 = arith.cmpi ne, %23, %c0_i32_15 : i32
    scf.if %24 {
      %c0_16 = arith.constant 0 : index
      %c0_17 = arith.constant 0 : index
      %c0_18 = arith.constant 0 : index
      %25 = vector.load %arg5[%c0_16, %c0_17, %c0_18] : memref<1x8x8xf32, #tpu.memory_space<vmem>>, vector<1x8x8xf32>
      %26 = vector.shape_cast %25 : vector<1x8x8xf32> to vector<8x8xf32>
      %cst_19 = arith.constant dense<0xFF800000> : vector<8xf32>
      %27 = vector.multi_reduction <maximumf>, %26, %cst_19 [1] : vector<8x8xf32> to vector<8xf32>
      %28 = vector.shape_cast %27 : vector<8xf32> to vector<8x1xf32>
      %29 = vector.broadcast %28 : vector<8x1xf32> to vector<8x8xf32>
      %30 = arith.subf %26, %29 : vector<8x8xf32>
      %31 = math.exp %30 : vector<8x8xf32>
      %cst_20 = arith.constant dense<0.000000e+00> : vector<8xf32>
      %32 = vector.multi_reduction <add>, %31, %cst_20 [1] : vector<8x8xf32> to vector<8xf32>
      %33 = vector.shape_cast %32 : vector<8xf32> to vector<8x1xf32>
      %34 = tpu.reciprocal %33 {approx = true} : vector<8x1xf32> -> vector<8x1xf32>
      %35 = vector.broadcast %34 : vector<8x1xf32> to vector<8x8xf32>
      %36 = arith.mulf %31, %35 : vector<8x8xf32>
      %c0_21 = arith.constant 0 : index
      %c0_22 = arith.constant 0 : index
      %c0_23 = arith.constant 0 : index
      %37 = vector.load %arg5[%c0_21, %c0_22, %c0_23] : memref<1x8x8xf32, #tpu.memory_space<vmem>>, vector<1x8x8xf32>
      %38 = vector.shape_cast %37 : vector<1x8x8xf32> to vector<8x8xf32>
      %39 = vector.shape_cast %36 : vector<8x8xf32> to vector<1x8x8xf32>
      tpu.vector_store %arg5[%c0_21, %c0_22, %c0_23], %39 {strides = array<i32>} : memref<1x8x8xf32, #tpu.memory_space<vmem>>, vector<1x8x8xf32>,
    } else {
    }
    return
  }
  func.func @transform_0(%arg0: i32, %arg1: i32) -> (i32, i32, i32) {
    %c0_i32 = arith.constant 0 : i32
    %c0_i32_0 = arith.constant 0 : i32
    return %arg0, %c0_i32, %arg1 : i32, i32, i32
  }
  func.func @transform_1(%arg0: i32, %arg1: i32) -> (i32, i32) {
    %c0_i32 = arith.constant 0 : i32
    %c0_i32_0 = arith.constant 0 : i32
    %c0_i32_1 = arith.constant 0 : i32
    return %c0_i32, %c0_i32_0 : i32, i32
  }
  func.func @transform_2(%arg0: i32, %arg1: i32) -> (i32, i32) {
    %c0_i32 = arith.constant 0 : i32
    %c0_i32_0 = arith.constant 0 : i32
    %c0_i32_1 = arith.constant 0 : i32
    return %c0_i32, %c0_i32_0 : i32, i32
  }
  func.func @transform_3(%arg0: i32, %arg1: i32) -> (i32, i32, i32) {
    %c0_i32 = arith.constant 0 : i32
    %c0_i32_0 = arith.constant 0 : i32
    %c0_i32_1 = arith.constant 0 : i32
    return %arg0, %c0_i32, %c0_i32_0 : i32, i32, i32
  }
}

</mosaic_0001>

<llo_original>
// kernel: rsa_block.2
$region0: #{rsa_block.2}
  #allocation0 [shape = 'u32[]', space=smem, size = 0x4, offset = 0x4, fixed_abs, tag = 'smem constant byte address 0x4 - core index']
  #allocation1 [shape = 'u32[144,128]{1,0:T(1,128)}', space=vmem, size = 0x12000, scoped, tag = 'internal scratch']
  %s0 = inlined_call_operand.vmem [shape: f32[2,8,256], index: 0, kind: input, shape index: {}]
  %s1 = inlined_call_operand.vmem [shape: bf16[16,8], index: 1, kind: input, shape index: {}]
  %s2 = inlined_call_operand.vmem [shape: f32[16,1], index: 2, kind: input, shape index: {}]
  %s3 = inlined_call_operand.vmem [shape: f32[2,8,8], index: 3, kind: output, shape index: {}]
  %s4 = sld [smem:[#allocation0]]
  $region53: #{rsa_block.2} parent=0
    _
  %s6 = ssub.s32 1, %s4
  %s7 = scalar_select 0, %s6, %s4
  loop: start=0, step=1, limit=4
  $region2: #{rsa_block.2} parent=0 // loop_pre_header
    _
  $region3: #{rsa_block.2} parent=0 // loop_header
    %s9 = sphi 0, %s13
    %p10 = scmp.ge.s32.totalorder %s9, 4
    %s16 = sphi 0, %s28
    %s17 = sphi 0, %s24
    %s18 = sphi 0, %s16
    %s19 = sphi 0, %s17
    %s20 = sphi 0, %s18
    %s21 = sphi 0, %s19
    %s33 = sphi 0, %s35
    %s36 = sphi 0, %s33
    %s37 = sphi 0, %s36
    %s53 = sphi 0, %s37
    %s57 = sphi 0, %s57
    %s59 = sphi 0, %s57
    %s60 = sphi 0, %s59
    %s74 = sphi 0, %s60
    %s78 = sphi 0, %s78
    %s80 = sphi 0, %s78
    %s81 = sphi 0, %s80
    %s95 = sphi 0, %s81
    %s101 = sphi 0, %s103
    %s104 = sphi 0, %s101
    %s105 = sphi 0, %s104
    %s121 = sphi 0, %s105
  $region4: #{rsa_block.2} parent=0 // loop_header_branch
    %12 = sbr.rel (%p10) target = $region8
  $region5: #{rsa_block.2} parent=0 // loop_body
    %s14 = ssub.s32 %s9, 1
    %s15 = ssub.s32 %s9, 2
    %s22 = sadd.s32 1, %s17
    %p23 = scmp.ge.s32.totalorder %s22, 1
    %s24 = scalar_select %p23, 0, %s22
    %s25 = sadd.s32 1, %s16
    %s26 = scalar_select %p23, %s25, %s16
    %p27 = scmp.ge.s32.totalorder %s26, 2
    %s28 = scalar_select %p27, 0, %s26
    %s29 = ssub.s32 %s16, %s28
    %s30 = ssub.s32 %s17, %s24
    %s31 = sor.u32 %s29, %s30
    %p32 = scmp.eq.s32.totalorder %s31, 0
    %s34 = sadd.s32 %s33, 1
    %s35 = scalar_select %p32, %s33, %s34
    %p38 = pneg %p32
    %p39 = scmp.eq.s32.totalorder %s9, 1
    %p40 = por %p38, %p39
    %p41 = scmp.ne.s32.totalorder %s33, %s36
    %p42 = scmp.eq.s32.totalorder %s9, 0
    %p43 = por %p41, %p42
    %p44 = scmp.ne.s32.totalorder %s33, %s36
    %p45 = scmp.eq.s32.totalorder %s14, 1
    %p46 = por %p44, %p45
    %p47 = scmp.ne.s32.totalorder %s36, %s37
    %p48 = scmp.eq.s32.totalorder %s14, 0
    %p49 = por %p47, %p48
    %p50 = scmp.ne.s32.totalorder %s36, %s37
    %p51 = scmp.eq.s32.totalorder %s15, 1
    %p52 = por %p50, %p51
    %p54 = scmp.ne.s32.totalorder %s37, %s53
    %p55 = scmp.eq.s32.totalorder %s15, 0
    %p56 = por %p54, %p55
    %s58 = sadd.s32 %s57, 1
    %p61 = scmp.eq.s32.totalorder %s9, 1
    %p62 = scmp.ne.s32.totalorder %s57, %s59
    %p63 = scmp.eq.s32.totalorder %s9, 0
    %p64 = por %p62, %p63
    %p65 = scmp.ne.s32.totalorder %s57, %s59
    %p66 = scmp.eq.s32.totalorder %s14, 1
    %p67 = por %p65, %p66
    %p68 = scmp.ne.s32.totalorder %s59, %s60
    %p69 = scmp.eq.s32.totalorder %s14, 0
    %p70 = por %p68, %p69
    %p71 = scmp.ne.s32.totalorder %s59, %s60
    %p72 = scmp.eq.s32.totalorder %s15, 1
    %p73 = por %p71, %p72
    %p75 = scmp.ne.s32.totalorder %s60, %s74
    %p76 = scmp.eq.s32.totalorder %s15, 0
    %p77 = por %p75, %p76
    %s79 = sadd.s32 %s78, 1
    %p82 = scmp.eq.s32.totalorder %s9, 1
    %p83 = scmp.ne.s32.totalorder %s78, %s80
    %p84 = scmp.eq.s32.totalorder %s9, 0
    %p85 = por %p83, %p84
    %p86 = scmp.ne.s32.totalorder %s78, %s80
    %p87 = scmp.eq.s32.totalorder %s14, 1
    %p88 = por %p86, %p87
    %p89 = scmp.ne.s32.totalorder %s80, %s81
    %p90 = scmp.eq.s32.totalorder %s14, 0
    %p91 = por %p89, %p90
    %p92 = scmp.ne.s32.totalorder %s80, %s81
    %p93 = scmp.eq.s32.totalorder %s15, 1
    %p94 = por %p92, %p93
    %p96 = scmp.ne.s32.totalorder %s81, %s95
    %p97 = scmp.eq.s32.totalorder %s15, 0
    %p98 = por %p96, %p97
    %s99 = ssub.s32 %s16, %s28
    %p100 = scmp.eq.s32.totalorder %s99, 0
    %s102 = sadd.s32 %s101, 1
    %s103 = scalar_select %p100, %s101, %s102
    %p106 = pneg %p100
    %p107 = scmp.eq.s32.totalorder %s9, 1
    %p108 = por %p106, %p107
    %p109 = scmp.ne.s32.totalorder %s101, %s104
    %p110 = scmp.eq.s32.totalorder %s9, 0
    %p111 = por %p109, %p110
    %p112 = scmp.ne.s32.totalorder %s101, %s104
    %p113 = scmp.eq.s32.totalorder %s14, 1
    %p114 = por %p112, %p113
    %p115 = scmp.ne.s32.totalorder %s104, %s105
    %p116 = scmp.eq.s32.totalorder %s14, 0
    %p117 = por %p115, %p116
    %p118 = scmp.ne.s32.totalorder %s104, %s105
    %p119 = scmp.eq.s32.totalorder %s15, 1
    %p120 = por %p118, %p119
    %p122 = scmp.ne.s32.totalorder %s105, %s121
    %p123 = scmp.eq.s32.totalorder %s15, 0
    %p124 = por %p122, %p123
    %p125 = scmp.le.s32.totalorder 1, %s9
    %p126 = scmp.lt.s32.totalorder %s9, 3
    %p127 = pnand %p125, %p126
    %p128 = pneg %p127
    // Predicated region
    $region9: #{rsa_block.2} parent=5 // pred_check
      _
    $region10: #{rsa_block.2} parent=5 // pred_check_branch
      %130 = sbr.rel (%p127) target = $region12
    $region11: #{rsa_block.2} parent=5 // pred_region
      %s131 = ssub.s32 %s9, 1
      // Predicated region
      $region13: #{rsa_block.2} parent=11 // pred_check
        %p132 = pneg %p70
      $region14: #{rsa_block.2} parent=11 // pred_check_branch
        %134 = sbr.rel (%p132) target = $region16
      $region15: #{rsa_block.2} parent=11 // pred_region
        _
      $region16: #{rsa_block.2} parent=11 // pred_fallthru
        _
      // Predicated region
      $region17: #{rsa_block.2} parent=11 // pred_check
        %p135 = pneg %p91
      $region18: #{rsa_block.2} parent=11 // pred_check_branch
        %137 = sbr.rel (%p135) target = $region20
      $region19: #{rsa_block.2} parent=11 // pred_region
        _
      $region20: #{rsa_block.2} parent=11 // pred_fallthru
        _
    $region12: #{rsa_block.2} parent=5 // pred_fallthru
      _
    %p138 = scmp.lt.s32.totalorder %s9, 2
    // Predicated region
    $region21: #{rsa_block.2} parent=5 // pred_check
      %p139 = pneg %p138
    $region22: #{rsa_block.2} parent=5 // pred_check_branch
      %141 = sbr.rel (%p139) target = $region24
    $region23: #{rsa_block.2} parent=5 // pred_region
      // Predicated region
      $region25: #{rsa_block.2} parent=23 // pred_check
        %p142 = pneg %p43
      $region26: #{rsa_block.2} parent=23 // pred_check_branch
        %144 = sbr.rel (%p142) target = $region28
      $region27: #{rsa_block.2} parent=23 // pred_region
        %s145 = smul.u32 2, %s17
        %p146 = scmp.lt.s32.totalorder %s16, 1
        %s147 = scalar_select %p146, %s16, 1
        %p148 = scmp.lt.s32.totalorder %s145, 1
        %s149 = scalar_select %p148, %s145, 1
        %s150 = smul.addr %s147, 2
        %s151 = sadd.s32 %s149, %s150
        %s152 = smul.addr %s151, 8
        %s153 = scalar_lea.vmem %s0, %s152
        %s154 = smul.u32 2, %s17
      $region28: #{rsa_block.2} parent=23 // pred_fallthru
        _
    $region24: #{rsa_block.2} parent=5 // pred_fallthru
      _
    %p155 = scmp.le.s32.totalorder 1, %s9
    %p156 = scmp.lt.s32.totalorder %s9, 3
    %p157 = pnand %p155, %p156
    %p158 = pneg %p157
    // Predicated region
    $region29: #{rsa_block.2} parent=5 // pred_check
      _
    $region30: #{rsa_block.2} parent=5 // pred_check_branch
      %160 = sbr.rel (%p157) target = $region32
    $region31: #{rsa_block.2} parent=5 // pred_region
      %s161 = ssub.s32 %s9, 1
      %s162 = smul.u32 2, %s19
      %p163 = scmp.lt.s32.totalorder %s18, 1
      %s164 = scalar_select %p163, %s18, 1
      %p165 = scmp.lt.s32.totalorder %s162, 1
      %s166 = scalar_select %p165, %s162, 1
      %s167 = smul.addr %s164, 2
      %s168 = sadd.s32 %s166, %s167
      %s169 = smul.addr %s168, 8
      %s170 = scalar_lea.vmem %s0, %s169
      %p171 = pneg %p49
      %p172 = pneg %p46
      %p173 = pneg %p70
      %p174 = pneg %p67
      %p175 = pneg %p91
      %p176 = pneg %p88
      %p177 = pneg %p117
      %p178 = pneg %p114
      %p179 = scmp.lt.s32.totalorder %s18, 1
      %s180 = scalar_select %p179, %s18, 1
      %s181 = smul.addr %s180, 8
      %s182 = scalar_lea.vmem %s3, %s181
      %s183 = smul.u32 2, %s19
      %p184 = scmp.lt.s32.totalorder %s18, 1
      %s185 = scalar_select %p184, %s18, 1
      %p186 = scmp.lt.s32.totalorder %s183, 1
      %s187 = scalar_select %p186, %s183, 1
      %s188 = smul.addr %s185, 2
      %s189 = sadd.s32 %s187, %s188
      %s190 = smul.addr %s189, 8
      %s191 = scalar_lea.vmem %s0, %s190
      %s192 = smul.u32 2, %s19
      %p193 = scmp.lt.s32.totalorder %s18, 1
      %s194 = scalar_select %p193, %s18, 1
      %s195 = smul.addr %s194, 8
      %s196 = scalar_lea.vmem %s3, %s195
      %p198 = scmp.eq.s32.totalorder %s19, 0
      // Predicated region
      $region33: #{rsa_block.2} parent=31 // pred_check
        %p199 = pneg %p198
      $region34: #{rsa_block.2} parent=31 // pred_check_branch
        %201 = sbr.rel (%p199) target = $region36
      $region35: #{rsa_block.2} parent=31 // pred_region
        %vm202 = vcmask 64512
        %203 = vst.msk [vmem:[%s196] sm:$0xff] %vm202, 0.0
      $region36: #{rsa_block.2} parent=31 // pred_fallthru
        _
      %v204 = vld [vmem:[%s191] sm:$0xff]
      %v205 = vld [vmem:[%s191 + $0x8] sm:$0xff]
      %v206 = vpack.c.bf16 %v204, %v204
      %v207 = vpack.c.bf16 %v205, %v205
      %v208 = vld [vmem:[%s1] sm:$0xf]
      %v209 = vld [vmem:[%s1 + $0x4] sm:$0xf]
      %v210 = vld [vmem:[%s2] sm:$0xff]
      %v211 = vld [vmem:[%s2 + $0x8] sm:$0xff]
      %213 = vset.pattern.permute.xlu0 0
      %214 = vperm.xlu0 %213, %v210
      %v215 = vpop.permute.xlu0 %214
      %218 = vset.pattern.permute.xlu0 0
      %219 = vperm.xlu0 %218, %v211
      %v220 = vpop.permute.xlu0 %219
      %v224 = vunpack.c.l.b16 %v208
      %v225 = vunpack.c.l.b16 %v209
      %v226 = vpack.c.b16 %v225, %v224
      %vm227 = vcmask 64512
      %v229 = vsel %vm227, %v226, 0
      %vm231 = vcmask 1043456
      %v233 = vsel %vm231, %v206, 0
      %v236 = vsel %vm231, %v207, 0
      %238 = vmatprep.subr.bf16.mxu0 %v236
      %239 = vmatpush1.bf16.msra.mxu0 %v233
      %240 = vmatprep.subr.bf16.mxu0 0
      %241 = vmatpush1.bf16.msra.mxu0 0
      %242 = vmatprep.subr.bf16.mxu0 0
      %243 = vmatpush1.bf16.msra.mxu0 0
      %244 = vmatprep.subr.bf16.mxu0 0
      %245 = vmatpush1.bf16.msra.mxu0 0
      %246 = vmatprep.subr.bf16.mxu0 0
      %247 = vmatpush1.bf16.msra.mxu0 0
      %248 = vmatprep.subr.bf16.mxu0 0
      %249 = vmatpush1.bf16.msra.mxu0 0
      %250 = vmatprep.subr.bf16.mxu0 0
      %251 = vmatpush1.bf16.msra.mxu0 0
      %252 = vmatprep.subr.bf16.mxu0 0
      %253 = vmatpush1.bf16.msra.mxu0 0
      %254 = vmatprep.subr.bf16.mxu0 0
      %255 = vmatpush1.bf16.msra.mxu0 0
      %256 = vmatprep.subr.bf16.mxu0 0
      %257 = vmatpush1.bf16.msra.mxu0 0
      %258 = vmatprep.subr.bf16.mxu0 0
      %259 = vmatpush1.bf16.msra.mxu0 0
      %260 = vmatprep.subr.bf16.mxu0 0
      %261 = vmatpush1.bf16.msra.mxu0 0
      %262 = vmatprep.subr.bf16.mxu0 0
      %263 = vmatpush1.bf16.msra.mxu0 0
      %264 = vmatprep.subr.bf16.mxu0 0
      %265 = vmatpush1.bf16.msra.mxu0 0
      %266 = vmatprep.subr.bf16.mxu0 0
      %267 = vmatpush1.bf16.msra.mxu0 0
      %268 = vmatprep.subr.bf16.mxu0 0
      %269 = vmatpush1.bf16.msra.mxu0 0
      %270 = vmatprep.mubr.bf16.mxu0 0
      %271 = vmatmul.mubr.bf16.gmra.mrb[0].mxu0 %v229
      %v272 = vpop.f32.mrb[0].mxu0
      %v273 = vadd.f32 %v215, %v272
      %v274 = vpop.f32.mrb[0].mxu0
      %v275 = vadd.f32 %v215, %v274
      %v276 = vpop.f32.mrb[0].mxu0
      %v277 = vadd.f32 %v220, %v276
      %v278 = vpop.f32.mrb[0].mxu0
      %v279 = vadd.f32 %v220, %v278
      %280 = vdwg.mxu0
      %v281 = vld [vmem:[%s196] sm:$0xff]
      %v282 = vpack.c.bf16 %v273, %v273
      %v283 = vpack.c.bf16 %v275, %v275
      %v284 = vpack.c.bf16 %v277, %v277
      %v285 = vpack.c.bf16 %v279, %v279
      %286 = vmatprep.subr.bf16.mxu0 %v285
      %287 = vmatpush1.bf16.xpose.msra.mxu0 %v284
      %288 = vmatprep.subr.bf16.mxu0 0
      %289 = vmatpush1.bf16.xpose.msra.mxu0 0
      %290 = vmatprep.subr.bf16.mxu0 0
      %291 = vmatpush1.bf16.xpose.msra.mxu0 0
      %292 = vmatprep.subr.bf16.mxu0 0
      %293 = vmatpush1.bf16.xpose.msra.mxu0 0
      %294 = vmatprep.subr.bf16.mxu0 0
      %295 = vmatpush1.bf16.xpose.msra.mxu0 0
      %296 = vmatprep.subr.bf16.mxu0 0
      %297 = vmatpush1.bf16.xpose.msra.mxu0 0
      %298 = vmatprep.subr.bf16.mxu0 0
      %299 = vmatpush1.bf16.xpose.msra.mxu0 0
      %300 = vmatprep.subr.bf16.mxu0 0
      %301 = vmatpush1.bf16.xpose.msra.mxu0 0
      %302 = vmatprep.subr.bf16.mxu0 0
      %303 = vmatpush1.bf16.xpose.msra.mxu0 0
      %304 = vmatprep.subr.bf16.mxu0 0
      %305 = vmatpush1.bf16.xpose.msra.mxu0 0
      %306 = vmatprep.subr.bf16.mxu0 0
      %307 = vmatpush1.bf16.xpose.msra.mxu0 0
      %308 = vmatprep.subr.bf16.mxu0 0
      %309 = vmatpush1.bf16.xpose.msra.mxu0 0
      %310 = vmatprep.subr.bf16.mxu0 0
      %311 = vmatpush1.bf16.xpose.msra.mxu0 0
      %312 = vmatprep.subr.bf16.mxu0 0
      %313 = vmatpush1.bf16.xpose.msra.mxu0 0
      %314 = vmatprep.subr.bf16.mxu0 0
      %315 = vmatpush1.bf16.xpose.msra.mxu0 0
      %316 = vmatprep.subr.bf16.mxu0 0
      %317 = vmatpush1.bf16.xpose.msra.mxu0 0
      %318 = vmatprep.mubr.bf16.mxu0 %v283
      %319 = vmatmul.mubr.bf16.gmra.mrb[0].mxu0 %v282
      %v320 = vpop.f32.mrb[0].mxu0
      %v321 = vadd.f32 0.0, %v320
      %v322 = vpop.f32.mrb[0].mxu0
      %v323 = vpop.f32.mrb[0].mxu0
      %v324 = vpop.f32.mrb[0].mxu0
      %325 = vdwg.mxu0
      %v326 = vadd.f32 %v281, %v321
      %327 = vst.msk [vmem:[%s196] sm:$0xff] %vm227, %v326
      // Predicated region
      $region37: #{rsa_block.2} parent=31 // pred_check
        %p328 = pneg %p198
      $region38: #{rsa_block.2} parent=31 // pred_check_branch
        %330 = sbr.rel (%p328) target = $region40
      $region39: #{rsa_block.2} parent=31 // pred_region
        %v331 = vld [vmem:[%s196] sm:$0xff]
        %v332 = vsel %vm227, %v331, -inf
        %333 = vmax.xlane.f32.xlu0 %v332
        %v334 = vpop.xlane.xlu0 %333
        %v335 = vsub.f32 %v331, %v334
        %v336 = vmul.f32 %v335, 1.442695
        %v337 = vpow.pop %v336
        %v338 = vsel %vm227, %v337, 0.0
        %339 = vadd.xlane.f32.xlu0 %v338
        %v340 = vpop.xlane.xlu0 %339
        %v341 = vrcp.pop %v340
        %v342 = vmul.f32 %v337, %v341
        %343 = vst.msk [vmem:[%s196] sm:$0xff] %vm227, %v342
      $region40: #{rsa_block.2} parent=31 // pred_fallthru
        _
      %p344 = scmp.lt.s32.totalorder %s18, 1
      %s345 = scalar_select %p344, %s18, 1
      %s346 = smul.addr %s345, 8
      %s347 = scalar_lea.vmem %s3, %s346
      // Predicated region
      $region41: #{rsa_block.2} parent=31 // pred_check
        %p348 = pneg %p114
      $region42: #{rsa_block.2} parent=31 // pred_check_branch
        %350 = sbr.rel (%p348) target = $region44
      $region43: #{rsa_block.2} parent=31 // pred_region
        _
      $region44: #{rsa_block.2} parent=31 // pred_fallthru
        _
    $region32: #{rsa_block.2} parent=5 // pred_fallthru
      _
    %p351 = scmp.le.s32.totalorder 2, %s9
    // Predicated region
    $region45: #{rsa_block.2} parent=5 // pred_check
      %p352 = pneg %p351
    $region46: #{rsa_block.2} parent=5 // pred_check_branch
      %354 = sbr.rel (%p352) target = $region48
    $region47: #{rsa_block.2} parent=5 // pred_region
      %s355 = ssub.s32 %s9, 2
      // Predicated region
      $region49: #{rsa_block.2} parent=47 // pred_check
        %p356 = pneg %p120
      $region50: #{rsa_block.2} parent=47 // pred_check_branch
        %358 = sbr.rel (%p356) target = $region52
      $region51: #{rsa_block.2} parent=47 // pred_region
        %p359 = scmp.lt.s32.totalorder %s20, 1
        %s360 = scalar_select %p359, %s20, 1
        %s361 = smul.addr %s360, 8
        %s362 = scalar_lea.vmem %s3, %s361
      $region52: #{rsa_block.2} parent=47 // pred_fallthru
        _
    $region48: #{rsa_block.2} parent=5 // pred_fallthru
      _
  $region6: #{rsa_block.2} parent=0 // loop_footer
    %s13 = sadd.s32 1, %s9
  $region7: #{rsa_block.2} parent=0 // loop_footer_branch
    %8 = sbr.rel target = $region3
  $region8: #{rsa_block.2} parent=0 // loop_exit
    _

// kernel: rsa_block.3
$region0: #{rsa_block.3}
  #allocation0 [shape = 'u32[]', space=smem, size = 0x4, offset = 0x4, fixed_abs, tag = 'smem constant byte address 0x4 - core index']
  #allocation1 [shape = 'u32[144,128]{1,0:T(1,128)}', space=vmem, size = 0x12000, scoped, tag = 'internal scratch']
  #allocation2 [shape = 'f32[1]{0:T(128)S(6)}', space=smem, size = 0x200, scoped, tag = 'scoped memory for rsa_block.3']
  %s0 = inlined_call_operand.vmem [shape: f32[2,8,256], index: 0, kind: input, shape index: {}]
  %s1 = inlined_call_operand.vmem [shape: f32[2,8,8], index: 1, kind: input, shape index: {}]
  %s2 = inlined_call_operand.vmem [shape: bf16[8,8], index: 2, kind: input, shape index: {}]
  %s3 = inlined_call_operand.vmem [shape: f32[8,1], index: 3, kind: input, shape index: {}]
  %s4 = inlined_call_operand.<no memory space> [shape: f32[1], index: 4, kind: input, shape index: {}]
  %s5 = inlined_call_operand.vmem [shape: f32[2,8,256], index: 5, kind: output, shape index: {}]
  %s6 = sld [smem:[#allocation0]]
  $region53: #{rsa_block.3} parent=0
    _
  %s8 = ssub.s32 1, %s6
  %s9 = scalar_select 0, %s8, %s6
  %10 = sst [smem:[#allocation2]] %s4
  loop: start=0, step=1, limit=4
  $region2: #{rsa_block.3} parent=0 // loop_pre_header
    _
  $region3: #{rsa_block.3} parent=0 // loop_header
    %s12 = sphi 0, %s16
    %p13 = scmp.ge.s32.totalorder %s12, 4
    %s19 = sphi 0, %s31
    %s20 = sphi 0, %s27
    %s21 = sphi 0, %s19
    %s22 = sphi 0, %s20
    %s23 = sphi 0, %s21
    %s24 = sphi 0, %s22
    %s36 = sphi 0, %s38
    %s39 = sphi 0, %s36
    %s40 = sphi 0, %s39
    %s56 = sphi 0, %s40
    %s62 = sphi 0, %s64
    %s65 = sphi 0, %s62
    %s66 = sphi 0, %s65
    %s82 = sphi 0, %s66
    %s86 = sphi 0, %s86
    %s88 = sphi 0, %s86
    %s89 = sphi 0, %s88
    %s103 = sphi 0, %s89
    %s107 = sphi 0, %s107
    %s109 = sphi 0, %s107
    %s110 = sphi 0, %s109
    %s124 = sphi 0, %s110
    %s128 = sphi 0, %s128
    %s130 = sphi 0, %s128
    %s131 = sphi 0, %s130
    %s145 = sphi 0, %s131
    %s153 = sphi 0, %s155
    %s156 = sphi 0, %s153
    %s157 = sphi 0, %s156
    %s173 = sphi 0, %s157
  $region4: #{rsa_block.3} parent=0 // loop_header_branch
    %15 = sbr.rel (%p13) target = $region8
  $region5: #{rsa_block.3} parent=0 // loop_body
    %s17 = ssub.s32 %s12, 1
    %s18 = ssub.s32 %s12, 2
    %s25 = sadd.s32 1, %s20
    %p26 = scmp.ge.s32.totalorder %s25, 1
    %s27 = scalar_select %p26, 0, %s25
    %s28 = sadd.s32 1, %s19
    %s29 = scalar_select %p26, %s28, %s19
    %p30 = scmp.ge.s32.totalorder %s29, 2
    %s31 = scalar_select %p30, 0, %s29
    %s32 = ssub.s32 %s19, %s31
    %s33 = ssub.s32 %s20, %s27
    %s34 = sor.u32 %s32, %s33
    %p35 = scmp.eq.s32.totalorder %s34, 0
    %s37 = sadd.s32 %s36, 1
    %s38 = scalar_select %p35, %s36, %s37
    %p41 = pneg %p35
    %p42 = scmp.eq.s32.totalorder %s12, 1
    %p43 = por %p41, %p42
    %p44 = scmp.ne.s32.totalorder %s36, %s39
    %p45 = scmp.eq.s32.totalorder %s12, 0
    %p46 = por %p44, %p45
    %p47 = scmp.ne.s32.totalorder %s36, %s39
    %p48 = scmp.eq.s32.totalorder %s17, 1
    %p49 = por %p47, %p48
    %p50 = scmp.ne.s32.totalorder %s39, %s40
    %p51 = scmp.eq.s32.totalorder %s17, 0
    %p52 = por %p50, %p51
    %p53 = scmp.ne.s32.totalorder %s39, %s40
    %p54 = scmp.eq.s32.totalorder %s18, 1
    %p55 = por %p53, %p54
    %p57 = scmp.ne.s32.totalorder %s40, %s56
    %p58 = scmp.eq.s32.totalorder %s18, 0
    %p59 = por %p57, %p58
    %s60 = ssub.s32 %s19, %s31
    %p61 = scmp.eq.s32.totalorder %s60, 0
    %s63 = sadd.s32 %s62, 1
    %s64 = scalar_select %p61, %s62, %s63
    %p67 = pneg %p61
    %p68 = scmp.eq.s32.totalorder %s12, 1
    %p69 = por %p67, %p68
    %p70 = scmp.ne.s32.totalorder %s62, %s65
    %p71 = scmp.eq.s32.totalorder %s12, 0
    %p72 = por %p70, %p71
    %p73 = scmp.ne.s32.totalorder %s62, %s65
    %p74 = scmp.eq.s32.totalorder %s17, 1
    %p75 = por %p73, %p74
    %p76 = scmp.ne.s32.totalorder %s65, %s66
    %p77 = scmp.eq.s32.totalorder %s17, 0
    %p78 = por %p76, %p77
    %p79 = scmp.ne.s32.totalorder %s65, %s66
    %p80 = scmp.eq.s32.totalorder %s18, 1
    %p81 = por %p79, %p80
    %p83 = scmp.ne.s32.totalorder %s66, %s82
    %p84 = scmp.eq.s32.totalorder %s18, 0
    %p85 = por %p83, %p84
    %s87 = sadd.s32 %s86, 1
    %p90 = scmp.eq.s32.totalorder %s12, 1
    %p91 = scmp.ne.s32.totalorder %s86, %s88
    %p92 = scmp.eq.s32.totalorder %s12, 0
    %p93 = por %p91, %p92
    %p94 = scmp.ne.s32.totalorder %s86, %s88
    %p95 = scmp.eq.s32.totalorder %s17, 1
    %p96 = por %p94, %p95
    %p97 = scmp.ne.s32.totalorder %s88, %s89
    %p98 = scmp.eq.s32.totalorder %s17, 0
    %p99 = por %p97, %p98
    %p100 = scmp.ne.s32.totalorder %s88, %s89
    %p101 = scmp.eq.s32.totalorder %s18, 1
    %p102 = por %p100, %p101
    %p104 = scmp.ne.s32.totalorder %s89, %s103
    %p105 = scmp.eq.s32.totalorder %s18, 0
    %p106 = por %p104, %p105
    %s108 = sadd.s32 %s107, 1
    %p111 = scmp.eq.s32.totalorder %s12, 1
    %p112 = scmp.ne.s32.totalorder %s107, %s109
    %p113 = scmp.eq.s32.totalorder %s12, 0
    %p114 = por %p112, %p113
    %p115 = scmp.ne.s32.totalorder %s107, %s109
    %p116 = scmp.eq.s32.totalorder %s17, 1
    %p117 = por %p115, %p116
    %p118 = scmp.ne.s32.totalorder %s109, %s110
    %p119 = scmp.eq.s32.totalorder %s17, 0
    %p120 = por %p118, %p119
    %p121 = scmp.ne.s32.totalorder %s109, %s110
    %p122 = scmp.eq.s32.totalorder %s18, 1
    %p123 = por %p121, %p122
    %p125 = scmp.ne.s32.totalorder %s110, %s124
    %p126 = scmp.eq.s32.totalorder %s18, 0
    %p127 = por %p125, %p126
    %s129 = sadd.s32 %s128, 1
    %p132 = scmp.eq.s32.totalorder %s12, 1
    %p133 = scmp.ne.s32.totalorder %s128, %s130
    %p134 = scmp.eq.s32.totalorder %s12, 0
    %p135 = por %p133, %p134
    %p136 = scmp.ne.s32.totalorder %s128, %s130
    %p137 = scmp.eq.s32.totalorder %s17, 1
    %p138 = por %p136, %p137
    %p139 = scmp.ne.s32.totalorder %s130, %s131
    %p140 = scmp.eq.s32.totalorder %s17, 0
    %p141 = por %p139, %p140
    %p142 = scmp.ne.s32.totalorder %s130, %s131
    %p143 = scmp.eq.s32.totalorder %s18, 1
    %p144 = por %p142, %p143
    %p146 = scmp.ne.s32.totalorder %s131, %s145
    %p147 = scmp.eq.s32.totalorder %s18, 0
    %p148 = por %p146, %p147
    %s149 = ssub.s32 %s19, %s31
    %s150 = ssub.s32 %s20, %s27
    %s151 = sor.u32 %s149, %s150
    %p152 = scmp.eq.s32.totalorder %s151, 0
    %s154 = sadd.s32 %s153, 1
    %s155 = scalar_select %p152, %s153, %s154
    %p158 = pneg %p152
    %p159 = scmp.eq.s32.totalorder %s12, 1
    %p160 = por %p158, %p159
    %p161 = scmp.ne.s32.totalorder %s153, %s156
    %p162 = scmp.eq.s32.totalorder %s12, 0
    %p163 = por %p161, %p162
    %p164 = scmp.ne.s32.totalorder %s153, %s156
    %p165 = scmp.eq.s32.totalorder %s17, 1
    %p166 = por %p164, %p165
    %p167 = scmp.ne.s32.totalorder %s156, %s157
    %p168 = scmp.eq.s32.totalorder %s17, 0
    %p169 = por %p167, %p168
    %p170 = scmp.ne.s32.totalorder %s156, %s157
    %p171 = scmp.eq.s32.totalorder %s18, 1
    %p172 = por %p170, %p171
    %p174 = scmp.ne.s32.totalorder %s157, %s173
    %p175 = scmp.eq.s32.totalorder %s18, 0
    %p176 = por %p174, %p175
    %p177 = scmp.le.s32.totalorder 1, %s12
    %p178 = scmp.lt.s32.totalorder %s12, 3
    %p179 = pnand %p177, %p178
    %p180 = pneg %p179
    // Predicated region
    $region9: #{rsa_block.3} parent=5 // pred_check
      _
    $region10: #{rsa_block.3} parent=5 // pred_check_branch
      %182 = sbr.rel (%p179) target = $region12
    $region11: #{rsa_block.3} parent=5 // pred_region
      %s183 = ssub.s32 %s12, 1
      // Predicated region
      $region13: #{rsa_block.3} parent=11 // pred_check
        %p184 = pneg %p99
      $region14: #{rsa_block.3} parent=11 // pred_check_branch
        %186 = sbr.rel (%p184) target = $region16
      $region15: #{rsa_block.3} parent=11 // pred_region
        _
      $region16: #{rsa_block.3} parent=11 // pred_fallthru
        _
      // Predicated region
      $region17: #{rsa_block.3} parent=11 // pred_check
        %p187 = pneg %p120
      $region18: #{rsa_block.3} parent=11 // pred_check_branch
        %189 = sbr.rel (%p187) target = $region20
      $region19: #{rsa_block.3} parent=11 // pred_region
        _
      $region20: #{rsa_block.3} parent=11 // pred_fallthru
        _
      // Predicated region
      $region21: #{rsa_block.3} parent=11 // pred_check
        %p190 = pneg %p141
      $region22: #{rsa_block.3} parent=11 // pred_check_branch
        %192 = sbr.rel (%p190) target = $region24
      $region23: #{rsa_block.3} parent=11 // pred_region
        _
      $region24: #{rsa_block.3} parent=11 // pred_fallthru
        _
    $region12: #{rsa_block.3} parent=5 // pred_fallthru
      _
    %p193 = scmp.lt.s32.totalorder %s12, 2
    // Predicated region
    $region25: #{rsa_block.3} parent=5 // pred_check
      %p194 = pneg %p193
    $region26: #{rsa_block.3} parent=5 // pred_check_branch
      %196 = sbr.rel (%p194) target = $region28
    $region27: #{rsa_block.3} parent=5 // pred_region
      // Predicated region
      $region29: #{rsa_block.3} parent=27 // pred_check
        %p197 = pneg %p46
      $region30: #{rsa_block.3} parent=27 // pred_check_branch
        %199 = sbr.rel (%p197) target = $region32
      $region31: #{rsa_block.3} parent=27 // pred_region
        %s200 = smul.u32 2, %s20
        %p201 = scmp.lt.s32.totalorder %s19, 1
        %s202 = scalar_select %p201, %s19, 1
        %p203 = scmp.lt.s32.totalorder %s200, 1
        %s204 = scalar_select %p203, %s200, 1
        %s205 = smul.addr %s202, 2
        %s206 = sadd.s32 %s204, %s205
        %s207 = smul.addr %s206, 8
        %s208 = scalar_lea.vmem %s0, %s207
        %s209 = smul.u32 2, %s20
      $region32: #{rsa_block.3} parent=27 // pred_fallthru
        _
      // Predicated region
      $region33: #{rsa_block.3} parent=27 // pred_check
        %p210 = pneg %p72
      $region34: #{rsa_block.3} parent=27 // pred_check_branch
        %212 = sbr.rel (%p210) target = $region36
      $region35: #{rsa_block.3} parent=27 // pred_region
        %p213 = scmp.lt.s32.totalorder %s19, 1
        %s214 = scalar_select %p213, %s19, 1
        %s215 = smul.addr %s214, 8
        %s216 = scalar_lea.vmem %s1, %s215
      $region36: #{rsa_block.3} parent=27 // pred_fallthru
        _
    $region28: #{rsa_block.3} parent=5 // pred_fallthru
      _
    %p217 = scmp.le.s32.totalorder 1, %s12
    %p218 = scmp.lt.s32.totalorder %s12, 3
    %p219 = pnand %p217, %p218
    %p220 = pneg %p219
    // Predicated region
    $region37: #{rsa_block.3} parent=5 // pred_check
      _
    $region38: #{rsa_block.3} parent=5 // pred_check_branch
      %222 = sbr.rel (%p219) target = $region40
    $region39: #{rsa_block.3} parent=5 // pred_region
      %s223 = ssub.s32 %s12, 1
      %s224 = smul.u32 2, %s22
      %p225 = scmp.lt.s32.totalorder %s21, 1
      %s226 = scalar_select %p225, %s21, 1
      %p227 = scmp.lt.s32.totalorder %s224, 1
      %s228 = scalar_select %p227, %s224, 1
      %s229 = smul.addr %s226, 2
      %s230 = sadd.s32 %s228, %s229
      %s231 = smul.addr %s230, 8
      %s232 = scalar_lea.vmem %s0, %s231
      %p233 = pneg %p52
      %p234 = pneg %p49
      %p235 = scmp.lt.s32.totalorder %s21, 1
      %s236 = scalar_select %p235, %s21, 1
      %s237 = smul.addr %s236, 8
      %s238 = scalar_lea.vmem %s1, %s237
      %p239 = pneg %p78
      %p240 = pneg %p75
      %p241 = pneg %p99
      %p242 = pneg %p96
      %p243 = pneg %p120
      %p244 = pneg %p117
      %p245 = pneg %p141
      %p246 = pneg %p138
      %p247 = pneg %p169
      %p248 = pneg %p166
      %s249 = smul.u32 2, %s22
      %p250 = scmp.lt.s32.totalorder %s21, 1
      %s251 = scalar_select %p250, %s21, 1
      %p252 = scmp.lt.s32.totalorder %s249, 1
      %s253 = scalar_select %p252, %s249, 1
      %s254 = smul.addr %s251, 2
      %s255 = sadd.s32 %s253, %s254
      %s256 = smul.addr %s255, 8
      %s257 = scalar_lea.vmem %s5, %s256
      %s258 = smul.u32 2, %s22
      %p259 = scmp.lt.s32.totalorder %s21, 1
      %s260 = scalar_select %p259, %s21, 1
      %p261 = scmp.lt.s32.totalorder %s258, 1
      %s262 = scalar_select %p261, %s258, 1
      %s263 = smul.addr %s260, 2
      %s264 = sadd.s32 %s262, %s263
      %s265 = smul.addr %s264, 8
      %s266 = scalar_lea.vmem %s0, %s265
      %s267 = smul.u32 2, %s22
      %p268 = scmp.lt.s32.totalorder %s21, 1
      %s269 = scalar_select %p268, %s21, 1
      %s270 = smul.addr %s269, 8
      %s271 = scalar_lea.vmem %s1, %s270
      %s272 = smul.u32 2, %s22
      %p273 = scmp.lt.s32.totalorder %s21, 1
      %s274 = scalar_select %p273, %s21, 1
      %p275 = scmp.lt.s32.totalorder %s272, 1
      %s276 = scalar_select %p275, %s272, 1
      %s277 = smul.addr %s274, 2
      %s278 = sadd.s32 %s276, %s277
      %s279 = smul.addr %s278, 8
      %s280 = scalar_lea.vmem %s5, %s279
      %s281 = smul.u32 2, %s22
      %v283 = vld [vmem:[%s266] sm:$0xff]
      %v284 = vld [vmem:[%s266 + $0x8] sm:$0xff]
      %v285 = vld [vmem:[%s2] sm:$0xf]
      %v286 = vpack.c.bf16 %v283, %v283
      %v287 = vpack.c.bf16 %v284, %v284
      %v288 = vld [vmem:[%s3] sm:$0xff]
      %290 = vset.pattern.permute.xlu0 0
      %291 = vperm.xlu0 %290, %v288
      %v292 = vpop.permute.xlu0 %291
      %vm294 = vcmask 64512
      %v296 = vsel %vm294, %v285, 0
      %vm298 = vcmask 1043456
      %v300 = vsel %vm298, %v286, 0
      %v303 = vsel %vm298, %v287, 0
      %305 = vmatprep.subr.bf16.mxu0 %v303
      %306 = vmatpush1.bf16.msra.mxu0 %v300
      %307 = vmatprep.subr.bf16.mxu0 0
      %308 = vmatpush1.bf16.msra.mxu0 0
      %309 = vmatprep.subr.bf16.mxu0 0
      %310 = vmatpush1.bf16.msra.mxu0 0
      %311 = vmatprep.subr.bf16.mxu0 0
      %312 = vmatpush1.bf16.msra.mxu0 0
      %313 = vmatprep.subr.bf16.mxu0 0
      %314 = vmatpush1.bf16.msra.mxu0 0
      %315 = vmatprep.subr.bf16.mxu0 0
      %316 = vmatpush1.bf16.msra.mxu0 0
      %317 = vmatprep.subr.bf16.mxu0 0
      %318 = vmatpush1.bf16.msra.mxu0 0
      %319 = vmatprep.subr.bf16.mxu0 0
      %320 = vmatpush1.bf16.msra.mxu0 0
      %321 = vmatprep.subr.bf16.mxu0 0
      %322 = vmatpush1.bf16.msra.mxu0 0
      %323 = vmatprep.subr.bf16.mxu0 0
      %324 = vmatpush1.bf16.msra.mxu0 0
      %325 = vmatprep.subr.bf16.mxu0 0
      %326 = vmatpush1.bf16.msra.mxu0 0
      %327 = vmatprep.subr.bf16.mxu0 0
      %328 = vmatpush1.bf16.msra.mxu0 0
      %329 = vmatprep.subr.bf16.mxu0 0
      %330 = vmatpush1.bf16.msra.mxu0 0
      %331 = vmatprep.subr.bf16.mxu0 0
      %332 = vmatpush1.bf16.msra.mxu0 0
      %333 = vmatprep.subr.bf16.mxu0 0
      %334 = vmatpush1.bf16.msra.mxu0 0
      %335 = vmatprep.subr.bf16.mxu0 0
      %336 = vmatpush1.bf16.msra.mxu0 0
      %337 = vmatprep.mubr.bf16.mxu0 0
      %338 = vmatmul.mubr.bf16.gmra.mrb[0].mxu0 %v296
      %v339 = vpop.f32.mrb[0].mxu0
      %v340 = vadd.f32 %v292, %v339
      %v341 = vpop.f32.mrb[0].mxu0
      %v342 = vadd.f32 %v292, %v341
      %v343 = vpop.f32.mrb[0].mxu0
      %v344 = vpop.f32.mrb[0].mxu0
      %345 = vdwg.mxu0
      %v346 = vld [vmem:[%s271] sm:$0xff]
      %v347 = vpack.c.bf16 %v346, %v346
      %v348 = vpack.c.bf16 %v340, %v340
      %v349 = vpack.c.bf16 %v342, %v342
      %v351 = vsel %vm294, %v347, 0
      %v354 = vsel %vm298, %v348, 0
      %v357 = vsel %vm298, %v349, 0
      %359 = vmatprep.subr.bf16.mxu0 %v357
      %360 = vmatpush1.bf16.msra.mxu0 %v354
      %361 = vmatprep.subr.bf16.mxu0 0
      %362 = vmatpush1.bf16.msra.mxu0 0
      %363 = vmatprep.subr.bf16.mxu0 0
      %364 = vmatpush1.bf16.msra.mxu0 0
      %365 = vmatprep.subr.bf16.mxu0 0
      %366 = vmatpush1.bf16.msra.mxu0 0
      %367 = vmatprep.subr.bf16.mxu0 0
      %368 = vmatpush1.bf16.msra.mxu0 0
      %369 = vmatprep.subr.bf16.mxu0 0
      %370 = vmatpush1.bf16.msra.mxu0 0
      %371 = vmatprep.subr.bf16.mxu0 0
      %372 = vmatpush1.bf16.msra.mxu0 0
      %373 = vmatprep.subr.bf16.mxu0 0
      %374 = vmatpush1.bf16.msra.mxu0 0
      %375 = vmatprep.subr.bf16.mxu0 0
      %376 = vmatpush1.bf16.msra.mxu0 0
      %377 = vmatprep.subr.bf16.mxu0 0
      %378 = vmatpush1.bf16.msra.mxu0 0
      %379 = vmatprep.subr.bf16.mxu0 0
      %380 = vmatpush1.bf16.msra.mxu0 0
      %381 = vmatprep.subr.bf16.mxu0 0
      %382 = vmatpush1.bf16.msra.mxu0 0
      %383 = vmatprep.subr.bf16.mxu0 0
      %384 = vmatpush1.bf16.msra.mxu0 0
      %385 = vmatprep.subr.bf16.mxu0 0
      %386 = vmatpush1.bf16.msra.mxu0 0
      %387 = vmatprep.subr.bf16.mxu0 0
      %388 = vmatpush1.bf16.msra.mxu0 0
      %389 = vmatprep.subr.bf16.mxu0 0
      %390 = vmatpush1.bf16.msra.mxu0 0
      %391 = vmatprep.mubr.bf16.mxu0 0
      %392 = vmatmul.mubr.bf16.gmra.mrb[0].mxu0 %v351
      %v393 = vpop.f32.mrb[0].mxu0
      %v394 = vadd.f32 0.0, %v393
      %v395 = vpop.f32.mrb[0].mxu0
      %v396 = vadd.f32 0.0, %v395
      %v397 = vpop.f32.mrb[0].mxu0
      %v398 = vpop.f32.mrb[0].mxu0
      %399 = vdwg.mxu0
      %s400 = sld [smem:[#allocation2]]
      %v401 = vstv %s400
      %v402 = vmul.f32 %v401, %v394
      %v403 = vmul.f32 %v401, %v396
      %v404 = vadd.f32 %v283, %v402
      %v405 = vadd.f32 %v284, %v403
      %406 = vst [vmem:[%s280] sm:$0xff] %v404
      %407 = vst [vmem:[%s280 + $0x8] sm:$0xff] %v405
      %s408 = smul.u32 2, %s22
      %p409 = scmp.lt.s32.totalorder %s21, 1
      %s410 = scalar_select %p409, %s21, 1
      %p411 = scmp.lt.s32.totalorder %s408, 1
      %s412 = scalar_select %p411, %s408, 1
      %s413 = smul.addr %s410, 2
      %s414 = sadd.s32 %s412, %s413
      %s415 = smul.addr %s414, 8
      %s416 = scalar_lea.vmem %s5, %s415
      // Predicated region
      $region41: #{rsa_block.3} parent=39 // pred_check
        %p417 = pneg %p166
      $region42: #{rsa_block.3} parent=39 // pred_check_branch
        %419 = sbr.rel (%p417) target = $region44
      $region43: #{rsa_block.3} parent=39 // pred_region
        %s420 = smul.u32 2, %s22
      $region44: #{rsa_block.3} parent=39 // pred_fallthru
        _
    $region40: #{rsa_block.3} parent=5 // pred_fallthru
      _
    %p421 = scmp.le.s32.totalorder 2, %s12
    // Predicated region
    $region45: #{rsa_block.3} parent=5 // pred_check
      %p422 = pneg %p421
    $region46: #{rsa_block.3} parent=5 // pred_check_branch
      %424 = sbr.rel (%p422) target = $region48
    $region47: #{rsa_block.3} parent=5 // pred_region
      %s425 = ssub.s32 %s12, 2
      // Predicated region
      $region49: #{rsa_block.3} parent=47 // pred_check
        %p426 = pneg %p172
      $region50: #{rsa_block.3} parent=47 // pred_check_branch
        %428 = sbr.rel (%p426) target = $region52
      $region51: #{rsa_block.3} parent=47 // pred_region
        %s429 = smul.u32 2, %s24
        %p430 = scmp.lt.s32.totalorder %s23, 1
        %s431 = scalar_select %p430, %s23, 1
        %p432 = scmp.lt.s32.totalorder %s429, 1
        %s433 = scalar_select %p432, %s429, 1
        %s434 = smul.addr %s431, 2
        %s435 = sadd.s32 %s433, %s434
        %s436 = smul.addr %s435, 8
        %s437 = scalar_lea.vmem %s5, %s436
      $region52: #{rsa_block.3} parent=47 // pred_fallthru
        _
    $region48: #{rsa_block.3} parent=5 // pred_fallthru
      _
  $region6: #{rsa_block.3} parent=0 // loop_footer
    %s16 = sadd.s32 1, %s12
  $region7: #{rsa_block.3} parent=0 // loop_footer_branch
    %11 = sbr.rel target = $region3
  $region8: #{rsa_block.3} parent=0 // loop_exit
    _

</llo_original>
